<compile_context>
chip_gen: v7x
topology: tpu7x:2x2x1
jax: 0.10.0
libtpu: 0.0.40
codegen_flags: <defaults>
</compile_context>

<pallas_src>
import functools

import jax
import jax.numpy as jnp
from jax.experimental import pallas as pl
from jax.experimental.pallas import tpu as pltpu

_HIDDEN = 256
_W3_LANES = 128  # fc3 weight padded to a full MXU lane tile (output stays 1-wide)


def _round_up(x, m):
    return ((x + m - 1) // m) * m


def _mlp_kernel(obs_ref, act_ref, w1o_ref, w1a_ref, b1_ref,
                w2_ref, b2_ref, w3_ref, b3_ref, out_ref):
    """Fused 3-layer MLP on one batch tile (bf16 MXU, f32 accumulate/bias/ReLU).

    h1 = relu(obs @ W1_obs + act @ W1_act + b1)
    h2 = relu(h1 @ W2 + b2)
    q  = (h2 @ W3_pad)[:, :1] + b3        # only lane 0 of W3_pad is meaningful
    """
    obs = obs_ref[...].astype(jnp.bfloat16)
    act = act_ref[...].astype(jnp.bfloat16)

    h1 = (jnp.dot(obs, w1o_ref[...], preferred_element_type=jnp.float32)
          + jnp.dot(act, w1a_ref[...], preferred_element_type=jnp.float32)
          + b1_ref[...])
    h1 = jnp.maximum(h1, 0.0).astype(jnp.bfloat16)

    h2 = jnp.dot(h1, w2_ref[...], preferred_element_type=jnp.float32) + b2_ref[...]
    h2 = jnp.maximum(h2, 0.0).astype(jnp.bfloat16)

    q = jnp.dot(h2, w3_ref[...], preferred_element_type=jnp.float32)  # (tm, 128)
    out_ref[...] = q[:, :1] + b3_ref[...]                             # (tm, 1)


@functools.partial(jax.jit, static_argnames=("block_m",))
def network_forward(obs, action, params, *, block_m=512):
    """Pallas-backed forward pass of Network.

    obs:    [B, obs_dim] float32
    action: [B, act_dim] float32
    params: (w1, b1, w2, b2, w3, b3) with w_i = [in, out], b_i = [1, out]
    returns [B, 1] float32
    """
    obs = obs.astype(jnp.float32)
    action = action.astype(jnp.float32)
    w1, b1, w2, b2, w3, b3 = params

    B, obs_dim = obs.shape
    act_dim = action.shape[1]
    H = w1.shape[1]

    # --- adaptive batch tiling --------------------------------------------
    b8 = _round_up(B, 8)                                   # sublane multiple
    n_tiles = max(pl.cdiv(b8, block_m), 2 if b8 > 128 else 1)
    tm = _round_up(pl.cdiv(b8, n_tiles), 8)                # rows per grid step
    b_pad = n_tiles * tm                                   # only a few pad rows
    if b_pad != B:
        obs = jnp.pad(obs, ((0, b_pad - B), (0, 0)))
        action = jnp.pad(action, ((0, b_pad - B), (0, 0)))

    # --- weights: split W1 (no concat); bf16 matmul operands ---------------
    w1o = w1[:obs_dim, :].astype(jnp.bfloat16)
    w1a = w1[obs_dim:, :].astype(jnp.bfloat16)
    w2b = w2.astype(jnp.bfloat16)
    w3p = jnp.pad(w3, ((0, 0), (0, _W3_LANES - w3.shape[1]))).astype(jnp.bfloat16)
    b1 = b1.astype(jnp.float32)
    b2 = b2.astype(jnp.float32)
    b3 = b3.astype(jnp.float32)

    act_tile = lambda i: (i, 0)   # activation tiles march over the batch
    resident = lambda i: (0, 0)   # weights/biases stay VMEM-resident

    out = pl.pallas_call(
        _mlp_kernel,
        out_shape=jax.ShapeDtypeStruct((b_pad, 1), jnp.float32),
        grid=(n_tiles,),
        in_specs=[
            pl.BlockSpec((tm, obs_dim), act_tile),
            pl.BlockSpec((tm, act_dim), act_tile),
            pl.BlockSpec((obs_dim, H), resident),
            pl.BlockSpec((act_dim, H), resident),
            pl.BlockSpec((1, H), resident),
            pl.BlockSpec((H, H), resident),
            pl.BlockSpec((1, H), resident),
            pl.BlockSpec((H, _W3_LANES), resident),
            pl.BlockSpec((1, 1), resident),
        ],
        out_specs=pl.BlockSpec((tm, 1), act_tile),
        compiler_params=pltpu.CompilerParams(
            dimension_semantics=("parallel",),
        ),
    )(obs, action, w1o, w1a, b1, w2b, b2, w3p, b3)

    # Strip the (small) batch padding only.
    return out[:B]


def init_params(key, obs_dim, act_dim, hidden=_HIDDEN):
    """Deterministic PyTorch-Linear-style init (uniform +/- 1/sqrt(fan_in))."""
    d_in = obs_dim + act_dim
    keys = jax.random.split(key, 6)

    def linear(kw, kb, fan_in, fan_out):
        bound = 1.0 / jnp.sqrt(float(fan_in))
        w = jax.random.uniform(kw, (fan_in, fan_out), jnp.float32, -bound, bound)
        b = jax.random.uniform(kb, (1, fan_out), jnp.float32, -bound, bound)
        return w, b

    w1, b1 = linear(keys[0], keys[1], d_in, hidden)
    w2, b2 = linear(keys[2], keys[3], hidden, hidden)
    w3, b3 = linear(keys[4], keys[5], hidden, 1)
    return (w1, b1, w2, b2, w3, b3)


def _reference_forward(obs, action, params):
    """Pure-JAX f32 reference matching the PyTorch module."""
    w1, b1, w2, b2, w3, b3 = params
    x = jnp.concatenate([obs, action], axis=1)
    h1 = jnp.maximum(x @ w1 + b1, 0.0)
    h2 = jnp.maximum(h1 @ w2 + b2, 0.0)
    return h2 @ w3 + b3


if __name__ == "__main__":
    key = jax.random.PRNGKey(0)
    k_obs, k_act, k_params = jax.random.split(key, 3)

    batch, obs_dim, act_dim = 8, 16, 8  # small env-like shapes
    obs = jax.random.normal(k_obs, (batch, obs_dim), jnp.float32)
    action = jax.random.normal(k_act, (batch, act_dim), jnp.float32)
    params = init_params(k_params, obs_dim, act_dim)

    out = jax.block_until_ready(network_forward(obs, action, params))
    ref = _reference_forward(obs, action, params)
    assert out.shape == (batch, 1), out.shape
    # bf16 matmul operands (f32 accumulate) -> loosened tolerance vs f32 ref.
    assert jnp.allclose(out, ref, atol=3e-2, rtol=3e-2)

    # Training-size, non-multiple-of-tile batch: exercises the 2-tile grid
    # (keeps both v7x TensorCores busy) and the few-row padded tail.
    big_b = 300
    kb1, kb2 = jax.random.split(jax.random.PRNGKey(1))
    obs_b = jax.random.normal(kb1, (big_b, obs_dim), jnp.float32)
    act_b = jax.random.normal(kb2, (big_b, act_dim), jnp.float32)
    out_b = jax.block_until_ready(network_forward(obs_b, act_b, params))
    ref_b = _reference_forward(obs_b, act_b, params)
    assert out_b.shape == (big_b, 1), out_b.shape
    assert jnp.allclose(out_b, ref_b, atol=3e-2, rtol=3e-2)

    print("KERNEL_OK")
</pallas_src>

<mosaic_0001>
module attributes {stable_mosaic.version = 11 : i64} {
  func.func @_mlp_kernel(%arg0: i32, %arg1: memref<8x16xf32, #tpu.memory_space<vmem>>, %arg2: memref<8x8xf32, #tpu.memory_space<vmem>>, %arg3: memref<16x256xbf16, #tpu.memory_space<vmem>>, %arg4: memref<8x256xbf16, #tpu.memory_space<vmem>>, %arg5: memref<1x256xf32, #tpu.memory_space<vmem>>, %arg6: memref<256x256xbf16, #tpu.memory_space<vmem>>, %arg7: memref<1x256xf32, #tpu.memory_space<vmem>>, %arg8: memref<256x128xbf16, #tpu.memory_space<vmem>>, %arg9: memref<1x1xf32, #tpu.memory_space<vmem>>, %arg10: memref<8x1xf32, #tpu.memory_space<vmem>>) attributes {dimension_semantics = [#tpu.dimension_semantics<parallel>], iteration_bounds = array<i64: 1>, scalar_prefetch = 0 : i64, scratch_operands = 0 : i64, tpu.core_type = #tpu.core_type<tc>, window_params = [{transform_indices = @transform_0, window_bounds = array<i64: 8, 16>}, {transform_indices = @transform_1, window_bounds = array<i64: 8, 8>}, {pipeline_mode = #tpu.pipeline_mode<synchronous>, transform_indices = @transform_2, window_bounds = array<i64: 16, 256>}, {pipeline_mode = #tpu.pipeline_mode<synchronous>, transform_indices = @transform_3, window_bounds = array<i64: 8, 256>}, {pipeline_mode = #tpu.pipeline_mode<synchronous>, transform_indices = @transform_4, window_bounds = array<i64: 1, 256>}, {pipeline_mode = #tpu.pipeline_mode<synchronous>, transform_indices = @transform_5, window_bounds = array<i64: 256, 256>}, {pipeline_mode = #tpu.pipeline_mode<synchronous>, transform_indices = @transform_6, window_bounds = array<i64: 1, 256>}, {pipeline_mode = #tpu.pipeline_mode<synchronous>, transform_indices = @transform_7, window_bounds = array<i64: 256, 128>}, {pipeline_mode = #tpu.pipeline_mode<synchronous>, transform_indices = @transform_8, window_bounds = array<i64: 1, 1>}, {transform_indices = @transform_9, window_bounds = array<i64: 8, 1>}]} {
    %c0 = arith.constant 0 : index
    %c0_0 = arith.constant 0 : index
    %0 = vector.load %arg1[%c0, %c0_0] : memref<8x16xf32, #tpu.memory_space<vmem>>, vector<8x16xf32>
    %1 = arith.truncf %0 : vector<8x16xf32> to vector<8x16xbf16>
    %c0_1 = arith.constant 0 : index
    %c0_2 = arith.constant 0 : index
    %2 = vector.load %arg2[%c0_1, %c0_2] : memref<8x8xf32, #tpu.memory_space<vmem>>, vector<8x8xf32>
    %3 = arith.truncf %2 : vector<8x8xf32> to vector<8x8xbf16>
    %c0_3 = arith.constant 0 : index
    %c0_4 = arith.constant 0 : index
    %4 = vector.load %arg3[%c0_3, %c0_4] : memref<16x256xbf16, #tpu.memory_space<vmem>>, vector<16x256xbf16>
    %cst = arith.constant dense<0.000000e+00> : vector<8x256xf32>
    %5 = tpu.matmul %1, %4, %cst {dimension_numbers = #tpu.dot_dimension_numbers<[1], [0], [0], [1], [0, 0, 1, 1], [], []>} : vector<8x16xbf16>, vector<16x256xbf16>, vector<8x256xf32> -> vector<8x256xf32>
    %c0_5 = arith.constant 0 : index
    %c0_6 = arith.constant 0 : index
    %6 = vector.load %arg4[%c0_5, %c0_6] : memref<8x256xbf16, #tpu.memory_space<vmem>>, vector<8x256xbf16>
    %cst_7 = arith.constant dense<0.000000e+00> : vector<8x256xf32>
    %7 = tpu.matmul %3, %6, %cst_7 {dimension_numbers = #tpu.dot_dimension_numbers<[1], [0], [0], [1], [0, 0, 1, 1], [], []>} : vector<8x8xbf16>, vector<8x256xbf16>, vector<8x256xf32> -> vector<8x256xf32>
    %8 = arith.addf %5, %7 : vector<8x256xf32>
    %c0_8 = arith.constant 0 : index
    %c0_9 = arith.constant 0 : index
    %9 = vector.load %arg5[%c0_8, %c0_9] : memref<1x256xf32, #tpu.memory_space<vmem>>, vector<1x256xf32>
    %10 = vector.broadcast %9 : vector<1x256xf32> to vector<8x256xf32>
    %11 = arith.addf %8, %10 : vector<8x256xf32>
    %cst_10 = arith.constant 0.000000e+00 : f32
    %12 = vector.broadcast %cst_10 : f32 to vector<8x256xf32>
    %13 = arith.maximumf %11, %12 : vector<8x256xf32>
    %14 = arith.truncf %13 : vector<8x256xf32> to vector<8x256xbf16>
    %c0_11 = arith.constant 0 : index
    %c0_12 = arith.constant 0 : index
    %15 = vector.load %arg6[%c0_11, %c0_12] : memref<256x256xbf16, #tpu.memory_space<vmem>>, vector<256x256xbf16>
    %cst_13 = arith.constant dense<0.000000e+00> : vector<8x256xf32>
    %16 = tpu.matmul %14, %15, %cst_13 {dimension_numbers = #tpu.dot_dimension_numbers<[1], [0], [0], [1], [0, 0, 1, 1], [], []>} : vector<8x256xbf16>, vector<256x256xbf16>, vector<8x256xf32> -> vector<8x256xf32>
    %c0_14 = arith.constant 0 : index
    %c0_15 = arith.constant 0 : index
    %17 = vector.load %arg7[%c0_14, %c0_15] : memref<1x256xf32, #tpu.memory_space<vmem>>, vector<1x256xf32>
    %18 = vector.broadcast %17 : vector<1x256xf32> to vector<8x256xf32>
    %19 = arith.addf %16, %18 : vector<8x256xf32>
    %cst_16 = arith.constant 0.000000e+00 : f32
    %20 = vector.broadcast %cst_16 : f32 to vector<8x256xf32>
    %21 = arith.maximumf %19, %20 : vector<8x256xf32>
    %22 = arith.truncf %21 : vector<8x256xf32> to vector<8x256xbf16>
    %c0_17 = arith.constant 0 : index
    %c0_18 = arith.constant 0 : index
    %23 = vector.load %arg8[%c0_17, %c0_18] : memref<256x128xbf16, #tpu.memory_space<vmem>>, vector<256x128xbf16>
    %cst_19 = arith.constant dense<0.000000e+00> : vector<8x128xf32>
    %24 = tpu.matmul %22, %23, %cst_19 {dimension_numbers = #tpu.dot_dimension_numbers<[1], [0], [0], [1], [0, 0, 1, 1], [], []>} : vector<8x256xbf16>, vector<256x128xbf16>, vector<8x128xf32> -> vector<8x128xf32>
    %25 = vector.extract_strided_slice %24 {offsets = [0, 0], sizes = [8, 1], strides = [1, 1]} : vector<8x128xf32> to vector<8x1xf32>
    %c0_20 = arith.constant 0 : index
    %c0_21 = arith.constant 0 : index
    %26 = vector.load %arg9[%c0_20, %c0_21] : memref<1x1xf32, #tpu.memory_space<vmem>>, vector<1x1xf32>
    %27 = vector.broadcast %26 : vector<1x1xf32> to vector<8x1xf32>
    %28 = arith.addf %25, %27 : vector<8x1xf32>
    %c0_22 = arith.constant 0 : index
    %c0_23 = arith.constant 0 : index
    %29 = vector.load %arg10[%c0_22, %c0_23] : memref<8x1xf32, #tpu.memory_space<vmem>>, vector<8x1xf32>
    tpu.vector_store %arg10[%c0_22, %c0_23], %28 {strides = array<i32>} : memref<8x1xf32, #tpu.memory_space<vmem>>, vector<8x1xf32>,
    return
  }
  func.func @transform_0(%arg0: i32) -> (i32, i32) {
    %c0_i32 = arith.constant 0 : i32
    %c0_i32_0 = arith.constant 0 : i32
    return %arg0, %c0_i32 : i32, i32
  }
  func.func @transform_1(%arg0: i32) -> (i32, i32) {
    %c0_i32 = arith.constant 0 : i32
    %c0_i32_0 = arith.constant 0 : i32
    return %arg0, %c0_i32 : i32, i32
  }
  func.func @transform_2(%arg0: i32) -> (i32, i32) {
    %c0_i32 = arith.constant 0 : i32
    %c0_i32_0 = arith.constant 0 : i32
    %c0_i32_1 = arith.constant 0 : i32
    return %c0_i32, %c0_i32_0 : i32, i32
  }
  func.func @transform_3(%arg0: i32) -> (i32, i32) {
    %c0_i32 = arith.constant 0 : i32
    %c0_i32_0 = arith.constant 0 : i32
    %c0_i32_1 = arith.constant 0 : i32
    return %c0_i32, %c0_i32_0 : i32, i32
  }
  func.func @transform_4(%arg0: i32) -> (i32, i32) {
    %c0_i32 = arith.constant 0 : i32
    %c0_i32_0 = arith.constant 0 : i32
    %c0_i32_1 = arith.constant 0 : i32
    return %c0_i32, %c0_i32_0 : i32, i32
  }
  func.func @transform_5(%arg0: i32) -> (i32, i32) {
    %c0_i32 = arith.constant 0 : i32
    %c0_i32_0 = arith.constant 0 : i32
    %c0_i32_1 = arith.constant 0 : i32
    return %c0_i32, %c0_i32_0 : i32, i32
  }
  func.func @transform_6(%arg0: i32) -> (i32, i32) {
    %c0_i32 = arith.constant 0 : i32
    %c0_i32_0 = arith.constant 0 : i32
    %c0_i32_1 = arith.constant 0 : i32
    return %c0_i32, %c0_i32_0 : i32, i32
  }
  func.func @transform_7(%arg0: i32) -> (i32, i32) {
    %c0_i32 = arith.constant 0 : i32
    %c0_i32_0 = arith.constant 0 : i32
    %c0_i32_1 = arith.constant 0 : i32
    return %c0_i32, %c0_i32_0 : i32, i32
  }
  func.func @transform_8(%arg0: i32) -> (i32, i32) {
    %c0_i32 = arith.constant 0 : i32
    %c0_i32_0 = arith.constant 0 : i32
    %c0_i32_1 = arith.constant 0 : i32
    return %c0_i32, %c0_i32_0 : i32, i32
  }
  func.func @transform_9(%arg0: i32) -> (i32, i32) {
    %c0_i32 = arith.constant 0 : i32
    %c0_i32_0 = arith.constant 0 : i32
    return %arg0, %c0_i32 : i32, i32
  }
}

</mosaic_0001>

<llo_original>
// kernel: network_forward.1
$region0: #{network_forward.1}
  #allocation0 [shape = 'u32[]', space=smem, size = 0x4, offset = 0x4, fixed_abs, tag = 'smem constant byte address 0x4 - core index']
  #allocation1 [shape = 'u32[144,128]{1,0:T(1,128)}', space=vmem, size = 0x12000, scoped, tag = 'internal scratch']
  #allocation2 [shape = 'f32[1,1]{1,0:T(1,128)S(1)}', space=vmem, size = 0x200, scoped, tag = 'scoped memory for network_forward.1']
  %s0 = inlined_call_operand.vmem [shape: f32[8,16], index: 0, kind: input, shape index: {}]
  %s1 = inlined_call_operand.vmem [shape: f32[8,8], index: 1, kind: input, shape index: {}]
  %s2 = inlined_call_operand.vmem [shape: bf16[16,256], index: 2, kind: input, shape index: {}]
  %s3 = inlined_call_operand.vmem [shape: bf16[8,256], index: 3, kind: input, shape index: {}]
  %s4 = inlined_call_operand.vmem [shape: f32[1,256], index: 4, kind: input, shape index: {}]
  %s5 = inlined_call_operand.vmem [shape: bf16[256,256], index: 5, kind: input, shape index: {}]
  %s6 = inlined_call_operand.vmem [shape: f32[1,256], index: 6, kind: input, shape index: {}]
  %s7 = inlined_call_operand.vmem [shape: bf16[256,128], index: 7, kind: input, shape index: {}]
  %s8 = inlined_call_operand.<no memory space> [shape: f32[1,1], index: 8, kind: input, shape index: {}]
  %s9 = inlined_call_operand.vmem [shape: f32[8,1], index: 9, kind: output, shape index: {}]
  %s10 = sld [smem:[#allocation0]]
  $region46: #{network_forward.1} parent=0
    _
  %s12 = ssub.s32 1, %s10
  %s13 = scalar_select 0, %s12, %s10
  %v14 = vstv %s8
  %15 = vst [vmem:[#allocation2] sm:$0x1] %v14
  // Predicated region
  $region2: #{network_forward.1} parent=0 // pred_check
    _
  $region3: #{network_forward.1} parent=0 // pred_check_branch
    %17 = sbr.rel (0) target = $region5
  $region4: #{network_forward.1} parent=0 // pred_region
    _
  $region5: #{network_forward.1} parent=0 // pred_fallthru
    _
  // Predicated region
  $region6: #{network_forward.1} parent=0 // pred_check
    _
  $region7: #{network_forward.1} parent=0 // pred_check_branch
    %19 = sbr.rel (0) target = $region9
  $region8: #{network_forward.1} parent=0 // pred_region
    _
  $region9: #{network_forward.1} parent=0 // pred_fallthru
    _
  // Predicated region
  $region10: #{network_forward.1} parent=0 // pred_check
    _
  $region11: #{network_forward.1} parent=0 // pred_check_branch
    %21 = sbr.rel (0) target = $region13
  $region12: #{network_forward.1} parent=0 // pred_region
    _
  $region13: #{network_forward.1} parent=0 // pred_fallthru
    _
  // Predicated region
  $region14: #{network_forward.1} parent=0 // pred_check
    _
  $region15: #{network_forward.1} parent=0 // pred_check_branch
    %23 = sbr.rel (0) target = $region17
  $region16: #{network_forward.1} parent=0 // pred_region
    _
  $region17: #{network_forward.1} parent=0 // pred_fallthru
    _
  // Predicated region
  $region18: #{network_forward.1} parent=0 // pred_check
    _
  $region19: #{network_forward.1} parent=0 // pred_check_branch
    %25 = sbr.rel (0) target = $region21
  $region20: #{network_forward.1} parent=0 // pred_region
    _
  $region21: #{network_forward.1} parent=0 // pred_fallthru
    _
  // Predicated region
  $region22: #{network_forward.1} parent=0 // pred_check
    _
  $region23: #{network_forward.1} parent=0 // pred_check_branch
    %27 = sbr.rel (0) target = $region25
  $region24: #{network_forward.1} parent=0 // pred_region
    _
  $region25: #{network_forward.1} parent=0 // pred_fallthru
    _
  // Predicated region
  $region26: #{network_forward.1} parent=0 // pred_check
    _
  $region27: #{network_forward.1} parent=0 // pred_check_branch
    %29 = sbr.rel (0) target = $region29
  $region28: #{network_forward.1} parent=0 // pred_region
    _
  $region29: #{network_forward.1} parent=0 // pred_fallthru
    _
  // Predicated region
  $region30: #{network_forward.1} parent=0 // pred_check
    _
  $region31: #{network_forward.1} parent=0 // pred_check_branch
    %31 = sbr.rel (0) target = $region33
  $region32: #{network_forward.1} parent=0 // pred_region
    _
  $region33: #{network_forward.1} parent=0 // pred_fallthru
    _
  // Predicated region
  $region34: #{network_forward.1} parent=0 // pred_check
    _
  $region35: #{network_forward.1} parent=0 // pred_check_branch
    %33 = sbr.rel (0) target = $region37
  $region36: #{network_forward.1} parent=0 // pred_region
    _
  $region37: #{network_forward.1} parent=0 // pred_fallthru
    _
  %v35 = vld [vmem:[%s0] sm:$0xff]
  %v36 = vpack.c.bf16 %v35, %v35
  %v37 = vld [vmem:[%s1] sm:$0xff]
  %v38 = vpack.c.bf16 %v37, %v37
  %v39 = vld [vmem:[%s2] sm:$0xff]
  %v40 = vld [vmem:[%s2 + $0x8] sm:$0xff]
  %v41 = vld [vmem:[%s3] sm:$0xff]
  %v43 = vunpack.c.l.b16 %v41
  %v44 = vunpack.c.h.b16 %v41
  %v45 = vpack.c.b16 %v43, %v43
  %v46 = vpack.c.b16 %v44, %v44
  %vm47 = vcmask 64512
  %v49 = vsel %vm47, %v38, 0
  %vm51 = vcmask 1043456
  %v53 = vsel %vm51, %v45, 0
  %v56 = vsel %vm51, %v46, 0
  %58 = vmatprep.subr.bf16.mxu0 %v56
  %59 = vmatpush1.bf16.msra.mxu0 %v53
  %60 = vmatprep.subr.bf16.mxu0 0
  %61 = vmatpush1.bf16.msra.mxu0 0
  %62 = vmatprep.subr.bf16.mxu0 0
  %63 = vmatpush1.bf16.msra.mxu0 0
  %64 = vmatprep.subr.bf16.mxu0 0
  %65 = vmatpush1.bf16.msra.mxu0 0
  %66 = vmatprep.subr.bf16.mxu0 0
  %67 = vmatpush1.bf16.msra.mxu0 0
  %68 = vmatprep.subr.bf16.mxu0 0
  %69 = vmatpush1.bf16.msra.mxu0 0
  %70 = vmatprep.subr.bf16.mxu0 0
  %71 = vmatpush1.bf16.msra.mxu0 0
  %72 = vmatprep.subr.bf16.mxu0 0
  %73 = vmatpush1.bf16.msra.mxu0 0
  %74 = vmatprep.subr.bf16.mxu0 0
  %75 = vmatpush1.bf16.msra.mxu0 0
  %76 = vmatprep.subr.bf16.mxu0 0
  %77 = vmatpush1.bf16.msra.mxu0 0
  %78 = vmatprep.subr.bf16.mxu0 0
  %79 = vmatpush1.bf16.msra.mxu0 0
  %80 = vmatprep.subr.bf16.mxu0 0
  %81 = vmatpush1.bf16.msra.mxu0 0
  %82 = vmatprep.subr.bf16.mxu0 0
  %83 = vmatpush1.bf16.msra.mxu0 0
  %84 = vmatprep.subr.bf16.mxu0 0
  %85 = vmatpush1.bf16.msra.mxu0 0
  %86 = vmatprep.subr.bf16.mxu0 0
  %87 = vmatpush1.bf16.msra.mxu0 0
  %88 = vmatprep.subr.bf16.mxu0 0
  %89 = vmatpush1.bf16.msra.mxu0 0
  %90 = vmatprep.mubr.bf16.mxu0 0
  %91 = vmatmul.mubr.bf16.gmra.mrb[0].mxu0 %v49
  %v92 = vpop.f32.mrb[0].mxu0
  %v93 = vadd.f32 0.0, %v92
  %v94 = vpop.f32.mrb[0].mxu0
  %v95 = vadd.f32 0.0, %v94
  %v96 = vpop.f32.mrb[0].mxu0
  %v97 = vpop.f32.mrb[0].mxu0
  %98 = vdwg.mxu0
  %v101 = vunpack.c.l.b16 %v39
  %v102 = vunpack.c.h.b16 %v39
  %v103 = vunpack.c.l.b16 %v40
  %v104 = vunpack.c.h.b16 %v40
  %v105 = vpack.c.b16 %v103, %v101
  %v106 = vpack.c.b16 %v104, %v102
  %vm109 = vcmask 130048
  %v111 = vsel %vm109, %v36, 0
  %113 = vmatprep.subr.bf16.mxu0 %v106
  %114 = vmatpush1.bf16.msra.mxu0 %v105
  %115 = vmatprep.subr.bf16.mxu0 0
  %116 = vmatpush1.bf16.msra.mxu0 0
  %117 = vmatprep.subr.bf16.mxu0 0
  %118 = vmatpush1.bf16.msra.mxu0 0
  %119 = vmatprep.subr.bf16.mxu0 0
  %120 = vmatpush1.bf16.msra.mxu0 0
  %121 = vmatprep.subr.bf16.mxu0 0
  %122 = vmatpush1.bf16.msra.mxu0 0
  %123 = vmatprep.subr.bf16.mxu0 0
  %124 = vmatpush1.bf16.msra.mxu0 0
  %125 = vmatprep.subr.bf16.mxu0 0
  %126 = vmatpush1.bf16.msra.mxu0 0
  %127 = vmatprep.subr.bf16.mxu0 0
  %128 = vmatpush1.bf16.msra.mxu0 0
  %129 = vmatprep.subr.bf16.mxu0 0
  %130 = vmatpush1.bf16.msra.mxu0 0
  %131 = vmatprep.subr.bf16.mxu0 0
  %132 = vmatpush1.bf16.msra.mxu0 0
  %133 = vmatprep.subr.bf16.mxu0 0
  %134 = vmatpush1.bf16.msra.mxu0 0
  %135 = vmatprep.subr.bf16.mxu0 0
  %136 = vmatpush1.bf16.msra.mxu0 0
  %137 = vmatprep.subr.bf16.mxu0 0
  %138 = vmatpush1.bf16.msra.mxu0 0
  %139 = vmatprep.subr.bf16.mxu0 0
  %140 = vmatpush1.bf16.msra.mxu0 0
  %141 = vmatprep.subr.bf16.mxu0 0
  %142 = vmatpush1.bf16.msra.mxu0 0
  %143 = vmatprep.subr.bf16.mxu0 0
  %144 = vmatpush1.bf16.msra.mxu0 0
  %145 = vmatprep.mubr.bf16.mxu0 0
  %146 = vmatmul.mubr.bf16.gmra.mrb[0].mxu0 %v111
  %v147 = vpop.f32.mrb[0].mxu0
  %v148 = vadd.f32 %v93, %v147
  %v149 = vpop.f32.mrb[0].mxu0
  %v150 = vadd.f32 %v95, %v149
  %v151 = vpop.f32.mrb[0].mxu0
  %v152 = vpop.f32.mrb[0].mxu0
  %153 = vdwg.mxu0
  %v154 = vld [vmem:[%s4] sm:$0x3]
  %v156 = vlaneseq
  %v157 = vshrl.u32 %v156, 7
  %v158 = vsub.s32 0, %v157
  %v159 = vrot.slane %v154, %v158
  %v160 = vlaneseq
  %v161 = vshrl.u32 %v160, 7
  %v162 = vsub.s32 1, %v161
  %v163 = vrot.slane %v154, %v162
  %v166 = vadd.f32 %v148, %v159
  %v167 = vadd.f32 %v150, %v163
  %v168 = vmax.f32 %v166, 0.0
  %v169 = vmax.f32 %v167, 0.0
  %v170 = vpack.c.bf16 %v168, %v168
  %v171 = vpack.c.bf16 %v169, %v169
  %v172 = vld [vmem:[%s5] sm:$0xff]
  %v173 = vld [vmem:[%s5 + $0x8] sm:$0xff]
  %v174 = vld [vmem:[%s5 + $0x10] sm:$0xff]
  %v175 = vld [vmem:[%s5 + $0x18] sm:$0xff]
  %v176 = vld [vmem:[%s5 + $0x20] sm:$0xff]
  %v177 = vld [vmem:[%s5 + $0x28] sm:$0xff]
  %v178 = vld [vmem:[%s5 + $0x30] sm:$0xff]
  %v179 = vld [vmem:[%s5 + $0x38] sm:$0xff]
  %v180 = vld [vmem:[%s5 + $0x40] sm:$0xff]
  %v181 = vld [vmem:[%s5 + $0x48] sm:$0xff]
  %v182 = vld [vmem:[%s5 + $0x50] sm:$0xff]
  %v183 = vld [vmem:[%s5 + $0x58] sm:$0xff]
  %v184 = vld [vmem:[%s5 + $0x60] sm:$0xff]
  %v185 = vld [vmem:[%s5 + $0x68] sm:$0xff]
  %v186 = vld [vmem:[%s5 + $0x70] sm:$0xff]
  %v187 = vld [vmem:[%s5 + $0x78] sm:$0xff]
  %v188 = vld [vmem:[%s5 + $0x80] sm:$0xff]
  %v189 = vld [vmem:[%s5 + $0x88] sm:$0xff]
  %v190 = vld [vmem:[%s5 + $0x90] sm:$0xff]
  %v191 = vld [vmem:[%s5 + $0x98] sm:$0xff]
  %v192 = vld [vmem:[%s5 + $0xa0] sm:$0xff]
  %v193 = vld [vmem:[%s5 + $0xa8] sm:$0xff]
  %v194 = vld [vmem:[%s5 + $0xb0] sm:$0xff]
  %v195 = vld [vmem:[%s5 + $0xb8] sm:$0xff]
  %v196 = vld [vmem:[%s5 + $0xc0] sm:$0xff]
  %v197 = vld [vmem:[%s5 + $0xc8] sm:$0xff]
  %v198 = vld [vmem:[%s5 + $0xd0] sm:$0xff]
  %v199 = vld [vmem:[%s5 + $0xd8] sm:$0xff]
  %v200 = vld [vmem:[%s5 + $0xe0] sm:$0xff]
  %v201 = vld [vmem:[%s5 + $0xe8] sm:$0xff]
  %v202 = vld [vmem:[%s5 + $0xf0] sm:$0xff]
  %v203 = vld [vmem:[%s5 + $0xf8] sm:$0xff]
  %v204 = vld [vmem:[%s6] sm:$0x3]
  %v206 = vlaneseq
  %v207 = vshrl.u32 %v206, 7
  %v208 = vsub.s32 0, %v207
  %v209 = vrot.slane %v204, %v208
  %v210 = vlaneseq
  %v211 = vshrl.u32 %v210, 7
  %v212 = vsub.s32 1, %v211
  %v213 = vrot.slane %v204, %v212
  %v248 = vunpack.c.l.b16 %v172
  %v249 = vunpack.c.h.b16 %v172
  %v250 = vunpack.c.l.b16 %v173
  %v251 = vunpack.c.h.b16 %v173
  %v252 = vunpack.c.l.b16 %v174
  %v253 = vunpack.c.h.b16 %v174
  %v254 = vunpack.c.l.b16 %v175
  %v255 = vunpack.c.h.b16 %v175
  %v256 = vunpack.c.l.b16 %v176
  %v257 = vunpack.c.h.b16 %v176
  %v258 = vunpack.c.l.b16 %v177
  %v259 = vunpack.c.h.b16 %v177
  %v260 = vunpack.c.l.b16 %v178
  %v261 = vunpack.c.h.b16 %v178
  %v262 = vunpack.c.l.b16 %v179
  %v263 = vunpack.c.h.b16 %v179
  %v264 = vunpack.c.l.b16 %v180
  %v265 = vunpack.c.h.b16 %v180
  %v266 = vunpack.c.l.b16 %v181
  %v267 = vunpack.c.h.b16 %v181
  %v268 = vunpack.c.l.b16 %v182
  %v269 = vunpack.c.h.b16 %v182
  %v270 = vunpack.c.l.b16 %v183
  %v271 = vunpack.c.h.b16 %v183
  %v272 = vunpack.c.l.b16 %v184
  %v273 = vunpack.c.h.b16 %v184
  %v274 = vunpack.c.l.b16 %v185
  %v275 = vunpack.c.h.b16 %v185
  %v276 = vunpack.c.l.b16 %v186
  %v277 = vunpack.c.h.b16 %v186
  %v278 = vunpack.c.l.b16 %v187
  %v279 = vunpack.c.h.b16 %v187
  %v280 = vunpack.c.l.b16 %v188
  %v281 = vunpack.c.h.b16 %v188
  %v282 = vunpack.c.l.b16 %v189
  %v283 = vunpack.c.h.b16 %v189
  %v284 = vunpack.c.l.b16 %v190
  %v285 = vunpack.c.h.b16 %v190
  %v286 = vunpack.c.l.b16 %v191
  %v287 = vunpack.c.h.b16 %v191
  %v288 = vunpack.c.l.b16 %v192
  %v289 = vunpack.c.h.b16 %v192
  %v290 = vunpack.c.l.b16 %v193
  %v291 = vunpack.c.h.b16 %v193
  %v292 = vunpack.c.l.b16 %v194
  %v293 = vunpack.c.h.b16 %v194
  %v294 = vunpack.c.l.b16 %v195
  %v295 = vunpack.c.h.b16 %v195
  %v296 = vunpack.c.l.b16 %v196
  %v297 = vunpack.c.h.b16 %v196
  %v298 = vunpack.c.l.b16 %v197
  %v299 = vunpack.c.h.b16 %v197
  %v300 = vunpack.c.l.b16 %v198
  %v301 = vunpack.c.h.b16 %v198
  %v302 = vunpack.c.l.b16 %v199
  %v303 = vunpack.c.h.b16 %v199
  %v304 = vunpack.c.l.b16 %v200
  %v305 = vunpack.c.h.b16 %v200
  %v306 = vunpack.c.l.b16 %v201
  %v307 = vunpack.c.h.b16 %v201
  %v308 = vunpack.c.l.b16 %v202
  %v309 = vunpack.c.h.b16 %v202
  %v310 = vunpack.c.l.b16 %v203
  %v311 = vunpack.c.h.b16 %v203
  %v312 = vpack.c.b16 %v250, %v248
  %v313 = vpack.c.b16 %v251, %v249
  %v314 = vpack.c.b16 %v254, %v252
  %v315 = vpack.c.b16 %v255, %v253
  %v316 = vpack.c.b16 %v258, %v256
  %v317 = vpack.c.b16 %v259, %v257
  %v318 = vpack.c.b16 %v262, %v260
  %v319 = vpack.c.b16 %v263, %v261
  %v320 = vpack.c.b16 %v266, %v264
  %v321 = vpack.c.b16 %v267, %v265
  %v322 = vpack.c.b16 %v270, %v268
  %v323 = vpack.c.b16 %v271, %v269
  %v324 = vpack.c.b16 %v274, %v272
  %v325 = vpack.c.b16 %v275, %v273
  %v326 = vpack.c.b16 %v278, %v276
  %v327 = vpack.c.b16 %v279, %v277
  %v328 = vpack.c.b16 %v282, %v280
  %v329 = vpack.c.b16 %v283, %v281
  %v330 = vpack.c.b16 %v286, %v284
  %v331 = vpack.c.b16 %v287, %v285
  %v332 = vpack.c.b16 %v290, %v288
  %v333 = vpack.c.b16 %v291, %v289
  %v334 = vpack.c.b16 %v294, %v292
  %v335 = vpack.c.b16 %v295, %v293
  %v336 = vpack.c.b16 %v298, %v296
  %v337 = vpack.c.b16 %v299, %v297
  %v338 = vpack.c.b16 %v302, %v300
  %v339 = vpack.c.b16 %v303, %v301
  %v340 = vpack.c.b16 %v306, %v304
  %v341 = vpack.c.b16 %v307, %v305
  %v342 = vpack.c.b16 %v310, %v308
  %v343 = vpack.c.b16 %v311, %v309
  %376 = vmatprep.subr.bf16.mxu0 %v313
  %377 = vmatpush1.bf16.msra.mxu0 %v312
  %378 = vmatprep.subr.bf16.mxu0 %v315
  %379 = vmatpush1.bf16.msra.mxu0 %v314
  %380 = vmatprep.subr.bf16.mxu0 %v317
  %381 = vmatpush1.bf16.msra.mxu0 %v316
  %382 = vmatprep.subr.bf16.mxu0 %v319
  %383 = vmatpush1.bf16.msra.mxu0 %v318
  %384 = vmatprep.subr.bf16.mxu0 %v321
  %385 = vmatpush1.bf16.msra.mxu0 %v320
  %386 = vmatprep.subr.bf16.mxu0 %v323
  %387 = vmatpush1.bf16.msra.mxu0 %v322
  %388 = vmatprep.subr.bf16.mxu0 %v325
  %389 = vmatpush1.bf16.msra.mxu0 %v324
  %390 = vmatprep.subr.bf16.mxu0 %v327
  %391 = vmatpush1.bf16.msra.mxu0 %v326
  %392 = vmatprep.subr.bf16.mxu0 %v329
  %393 = vmatpush1.bf16.msra.mxu0 %v328
  %394 = vmatprep.subr.bf16.mxu0 %v331
  %395 = vmatpush1.bf16.msra.mxu0 %v330
  %396 = vmatprep.subr.bf16.mxu0 %v333
  %397 = vmatpush1.bf16.msra.mxu0 %v332
  %398 = vmatprep.subr.bf16.mxu0 %v335
  %399 = vmatpush1.bf16.msra.mxu0 %v334
  %400 = vmatprep.subr.bf16.mxu0 %v337
  %401 = vmatpush1.bf16.msra.mxu0 %v336
  %402 = vmatprep.subr.bf16.mxu0 %v339
  %403 = vmatpush1.bf16.msra.mxu0 %v338
  %404 = vmatprep.subr.bf16.mxu0 %v341
  %405 = vmatpush1.bf16.msra.mxu0 %v340
  %406 = vmatprep.subr.bf16.mxu0 %v343
  %407 = vmatpush1.bf16.msra.mxu0 %v342
  %408 = vmatprep.mubr.bf16.mxu0 %v171
  %409 = vmatmul.mubr.bf16.gmra.mrb[0].mxu0 %v170
  %v410 = vpop.f32.mrb[0].mxu0
  %v411 = vadd.f32 %v209, %v410
  %v412 = vpop.f32.mrb[0].mxu0
  %v413 = vadd.f32 %v213, %v412
  %v414 = vpop.f32.mrb[0].mxu0
  %v415 = vpop.f32.mrb[0].mxu0
  %416 = vdwg.mxu0
  %v417 = vmax.f32 %v411, 0.0
  %v418 = vmax.f32 %v413, 0.0
  %v419 = vpack.c.bf16 %v417, %v417
  %v420 = vpack.c.bf16 %v418, %v418
  %v421 = vld [vmem:[%s7] sm:$0xf]
  %v422 = vld [vmem:[%s7 + $0x4] sm:$0xf]
  %v423 = vld [vmem:[%s7 + $0x8] sm:$0xf]
  %v424 = vld [vmem:[%s7 + $0xc] sm:$0xf]
  %v425 = vld [vmem:[%s7 + $0x10] sm:$0xf]
  %v426 = vld [vmem:[%s7 + $0x14] sm:$0xf]
  %v427 = vld [vmem:[%s7 + $0x18] sm:$0xf]
  %v428 = vld [vmem:[%s7 + $0x1c] sm:$0xf]
  %v429 = vld [vmem:[%s7 + $0x20] sm:$0xf]
  %v430 = vld [vmem:[%s7 + $0x24] sm:$0xf]
  %v431 = vld [vmem:[%s7 + $0x28] sm:$0xf]
  %v432 = vld [vmem:[%s7 + $0x2c] sm:$0xf]
  %v433 = vld [vmem:[%s7 + $0x30] sm:$0xf]
  %v434 = vld [vmem:[%s7 + $0x34] sm:$0xf]
  %v435 = vld [vmem:[%s7 + $0x38] sm:$0xf]
  %v436 = vld [vmem:[%s7 + $0x3c] sm:$0xf]
  %v437 = vld [vmem:[%s7 + $0x40] sm:$0xf]
  %v438 = vld [vmem:[%s7 + $0x44] sm:$0xf]
  %v439 = vld [vmem:[%s7 + $0x48] sm:$0xf]
  %v440 = vld [vmem:[%s7 + $0x4c] sm:$0xf]
  %v441 = vld [vmem:[%s7 + $0x50] sm:$0xf]
  %v442 = vld [vmem:[%s7 + $0x54] sm:$0xf]
  %v443 = vld [vmem:[%s7 + $0x58] sm:$0xf]
  %v444 = vld [vmem:[%s7 + $0x5c] sm:$0xf]
  %v445 = vld [vmem:[%s7 + $0x60] sm:$0xf]
  %v446 = vld [vmem:[%s7 + $0x64] sm:$0xf]
  %v447 = vld [vmem:[%s7 + $0x68] sm:$0xf]
  %v448 = vld [vmem:[%s7 + $0x6c] sm:$0xf]
  %v449 = vld [vmem:[%s7 + $0x70] sm:$0xf]
  %v450 = vld [vmem:[%s7 + $0x74] sm:$0xf]
  %v451 = vld [vmem:[%s7 + $0x78] sm:$0xf]
  %v452 = vld [vmem:[%s7 + $0x7c] sm:$0xf]
  %v485 = vunpack.c.l.b16 %v421
  %v486 = vunpack.c.l.b16 %v422
  %v487 = vunpack.c.l.b16 %v423
  %v488 = vunpack.c.l.b16 %v424
  %v489 = vunpack.c.l.b16 %v425
  %v490 = vunpack.c.l.b16 %v426
  %v491 = vunpack.c.l.b16 %v427
  %v492 = vunpack.c.l.b16 %v428
  %v493 = vunpack.c.l.b16 %v429
  %v494 = vunpack.c.l.b16 %v430
  %v495 = vunpack.c.l.b16 %v431
  %v496 = vunpack.c.l.b16 %v432
  %v497 = vunpack.c.l.b16 %v433
  %v498 = vunpack.c.l.b16 %v434
  %v499 = vunpack.c.l.b16 %v435
  %v500 = vunpack.c.l.b16 %v436
  %v501 = vunpack.c.l.b16 %v437
  %v502 = vunpack.c.l.b16 %v438
  %v503 = vunpack.c.l.b16 %v439
  %v504 = vunpack.c.l.b16 %v440
  %v505 = vunpack.c.l.b16 %v441
  %v506 = vunpack.c.l.b16 %v442
  %v507 = vunpack.c.l.b16 %v443
  %v508 = vunpack.c.l.b16 %v444
  %v509 = vunpack.c.l.b16 %v445
  %v510 = vunpack.c.l.b16 %v446
  %v511 = vunpack.c.l.b16 %v447
  %v512 = vunpack.c.l.b16 %v448
  %v513 = vunpack.c.l.b16 %v449
  %v514 = vunpack.c.l.b16 %v450
  %v515 = vunpack.c.l.b16 %v451
  %v516 = vunpack.c.l.b16 %v452
  %v517 = vpack.c.b16 %v486, %v485
  %v518 = vpack.c.b16 %v488, %v487
  %v519 = vpack.c.b16 %v490, %v489
  %v520 = vpack.c.b16 %v492, %v491
  %v521 = vpack.c.b16 %v494, %v493
  %v522 = vpack.c.b16 %v496, %v495
  %v523 = vpack.c.b16 %v498, %v497
  %v524 = vpack.c.b16 %v500, %v499
  %v525 = vpack.c.b16 %v502, %v501
  %v526 = vpack.c.b16 %v504, %v503
  %v527 = vpack.c.b16 %v506, %v505
  %v528 = vpack.c.b16 %v508, %v507
  %v529 = vpack.c.b16 %v510, %v509
  %v530 = vpack.c.b16 %v512, %v511
  %v531 = vpack.c.b16 %v514, %v513
  %v532 = vpack.c.b16 %v516, %v515
  %549 = vmatprep.subr.bf16.mxu0 0
  %550 = vmatpush1.bf16.msra.mxu0 %v517
  %551 = vmatprep.subr.bf16.mxu0 0
  %552 = vmatpush1.bf16.msra.mxu0 %v518
  %553 = vmatprep.subr.bf16.mxu0 0
  %554 = vmatpush1.bf16.msra.mxu0 %v519
  %555 = vmatprep.subr.bf16.mxu0 0
  %556 = vmatpush1.bf16.msra.mxu0 %v520
  %557 = vmatprep.subr.bf16.mxu0 0
  %558 = vmatpush1.bf16.msra.mxu0 %v521
  %559 = vmatprep.subr.bf16.mxu0 0
  %560 = vmatpush1.bf16.msra.mxu0 %v522
  %561 = vmatprep.subr.bf16.mxu0 0
  %562 = vmatpush1.bf16.msra.mxu0 %v523
  %563 = vmatprep.subr.bf16.mxu0 0
  %564 = vmatpush1.bf16.msra.mxu0 %v524
  %565 = vmatprep.subr.bf16.mxu0 0
  %566 = vmatpush1.bf16.msra.mxu0 %v525
  %567 = vmatprep.subr.bf16.mxu0 0
  %568 = vmatpush1.bf16.msra.mxu0 %v526
  %569 = vmatprep.subr.bf16.mxu0 0
  %570 = vmatpush1.bf16.msra.mxu0 %v527
  %571 = vmatprep.subr.bf16.mxu0 0
  %572 = vmatpush1.bf16.msra.mxu0 %v528
  %573 = vmatprep.subr.bf16.mxu0 0
  %574 = vmatpush1.bf16.msra.mxu0 %v529
  %575 = vmatprep.subr.bf16.mxu0 0
  %576 = vmatpush1.bf16.msra.mxu0 %v530
  %577 = vmatprep.subr.bf16.mxu0 0
  %578 = vmatpush1.bf16.msra.mxu0 %v531
  %579 = vmatprep.subr.bf16.mxu0 0
  %580 = vmatpush1.bf16.msra.mxu0 %v532
  %581 = vmatprep.mubr.bf16.mxu0 %v420
  %582 = vmatmul.mubr.bf16.gmra.mrb[0].mxu0 %v419
  %v583 = vpop.f32.mrb[0].mxu0
  %v584 = vadd.f32 0.0, %v583
  %v585 = vpop.f32.mrb[0].mxu0
  %v586 = vpop.f32.mrb[0].mxu0
  %v587 = vpop.f32.mrb[0].mxu0
  %588 = vdwg.mxu0
  %v589 = vld [vmem:[#allocation2] sm:$0x1]
  %v591 = vlaneseq
  %v592 = vshrl.u32 %v591, 7
  %v593 = vsub.s32 0, %v592
  %v594 = vrot.slane %v589, %v593
  %v596 = vadd.f32 %v584, %v594
  %vm597 = vcmask 7168
  %598 = vst.msk [vmem:[%s9] sm:$0xff] %vm597, %v596
  // Predicated region
  $region38: #{network_forward.1} parent=0 // pred_check
    _
  $region39: #{network_forward.1} parent=0 // pred_check_branch
    %600 = sbr.rel (0) target = $region41
  $region40: #{network_forward.1} parent=0 // pred_region
    _
  $region41: #{network_forward.1} parent=0 // pred_fallthru
    _
  // Predicated region
  $region42: #{network_forward.1} parent=0 // pred_check
    _
  $region43: #{network_forward.1} parent=0 // pred_check_branch
    %602 = sbr.rel (0) target = $region45
  $region44: #{network_forward.1} parent=0 // pred_region
    _
  $region45: #{network_forward.1} parent=0 // pred_fallthru
    _

</llo_original>
